<compile_context>
chip_gen: v5e
topology: v5e:2x2
jax: 0.10.0
libtpu: 0.0.40
codegen_flags: <defaults>
</compile_context>

<pallas_src>
import functools
import math

import jax
import jax.numpy as jnp
from jax.experimental import pallas as pl
from jax.experimental.pallas import tpu as pltpu


def _token_embedding_kernel(tok_ref, table_hbm, out_ref, row_buf, sem, *,
                            scale, tile_n, depth, vocab_size):
    """DMA row-gather of a TN-token tile.

    tok_ref   : SMEM int32[(N_pad,)] -- all token ids (scalar-prefetched)
    table_hbm : HBM  [(V, E)]        -- embedding table (never copied whole)
    out_ref   : VMEM [(TN, E)]       -- gathered + scaled embeddings
    row_buf   : VMEM [(TN, E)]       -- DMA landing buffer
    sem       : DMA semaphores [(depth,)]
    """
    base = pl.program_id(0) * tile_n

    def _issue(r):
        tid = tok_ref[base + r]
        tid = jnp.clip(tid, 0, vocab_size - 1)      # jnp.take-style OOB clipping
        pltpu.make_async_copy(
            table_hbm.at[pl.ds(tid, 1), :],
            row_buf.at[pl.ds(r, 1), :],
            sem.at[r % depth],
        ).start()

    def _wait(r):
        pltpu.make_async_copy(
            table_hbm.at[pl.ds(0, 1), :],            # shape/size-matching descriptor
            row_buf.at[pl.ds(r, 1), :],
            sem.at[r % depth],
        ).wait()

    # Prologue: fill the outstanding-DMA window.
    @pl.loop(0, depth)
    def _(r):
        _issue(r)

    # Steady state: retire the oldest DMA, reuse its slot for the next row.
    @pl.loop(depth, tile_n)
    def _(r):
        _wait(r - depth)
        _issue(r)

    # Drain the tail.
    @pl.loop(tile_n - depth, tile_n)
    def _(r):
        _wait(r)

    # Single lane-dense store of the scaled tile (exact in f32 for f32 tables).
    out_ref[...] = (row_buf[...].astype(jnp.float32) * scale).astype(out_ref.dtype)


def token_embedding(tokens, emb_table, *, tile_n=256, max_outstanding=8):
    """tokens: (B, S) int  ->  (B, S, E), = emb_table[tokens] * sqrt(E)."""
    B, S = tokens.shape
    V, E = emb_table.shape
    N = B * S
    scale = float(math.sqrt(E))

    # Token tile: multiple of 8 sublanes, no larger than the (rounded-up) problem.
    tn = min(int(tile_n), ((N + 7) // 8) * 8)
    tn = max(8, (tn // 8) * 8)
    depth = max(1, min(int(max_outstanding), tn))

    num_tiles = pl.cdiv(N, tn)
    n_pad = num_tiles * tn

    tok_flat = tokens.reshape(N).astype(jnp.int32)
    if n_pad != N:
        # Pad with id 0 (a valid row); padded rows are sliced off below.
        tok_flat = jnp.pad(tok_flat, (0, n_pad - N))

    kernel = functools.partial(
        _token_embedding_kernel,
        scale=scale, tile_n=tn, depth=depth, vocab_size=V)

    # VMEM budget: row_buf + double-buffered output tile (+ headroom).
    # Independent of V -> fits scoped defaults on v5e/v6e/v7x.
    itemsize = jnp.dtype(emb_table.dtype).itemsize
    vmem_needed = 3 * tn * E * itemsize
    vmem_limit = int(min(max(2 * vmem_needed + (4 << 20), 16 << 20), 96 << 20))

    out_flat = pl.pallas_call(
        kernel,
        out_shape=jax.ShapeDtypeStruct((n_pad, E), emb_table.dtype),
        grid_spec=pltpu.PrefetchScalarGridSpec(
            num_scalar_prefetch=1,             # token ids -> SMEM
            grid=(num_tiles,),
            in_specs=[
                # Embedding table stays in HBM; rows are DMA-gathered manually.
                pl.BlockSpec(memory_space=pl.ANY),
            ],
            out_specs=pl.BlockSpec((tn, E), lambda i, tok: (i, 0)),
            scratch_shapes=[
                pltpu.VMEM((tn, E), emb_table.dtype),
                pltpu.SemaphoreType.DMA((depth,)),
            ],
        ),
        compiler_params=pltpu.CompilerParams(
            dimension_semantics=("parallel",),
            vmem_limit_bytes=vmem_limit,
        ),
    )(tok_flat, emb_table)

    return out_flat[:N].reshape(B, S, E)


if __name__ == "__main__":
    vocab_size = 32
    emb_size = 128
    B, S = 2, 8

    key = jax.random.PRNGKey(0)
    k_emb, k_tok = jax.random.split(key)

    # Deterministic synthetic parameters (nn.Embedding weight ~ N(0, 1)).
    emb_table = jax.random.normal(k_emb, (vocab_size, emb_size), dtype=jnp.float32)
    tokens = jax.random.randint(k_tok, (B, S), 0, vocab_size, dtype=jnp.int32)

    out = token_embedding(tokens, emb_table)
    out = jax.block_until_ready(out)

    # Pure-JAX reference check of forward semantics.
    ref = jnp.take(emb_table, tokens, axis=0) * math.sqrt(emb_size)
    assert out.shape == (B, S, emb_size)
    assert jnp.allclose(out, ref, atol=1e-5, rtol=1e-5)

    print("KERNEL_OK")
</pallas_src>

<mosaic_0001>
module attributes {stable_mosaic.version = 11 : i64} {
  func.func @_token_embedding_kernel(%arg0: i32, %arg1: memref<16xi32, #tpu.memory_space<smem>>, %arg2: memref<32x128xf32, #tpu.memory_space<any>>, %arg3: memref<16x128xf32, #tpu.memory_space<vmem>>, %arg4: memref<16x128xf32, #tpu.memory_space<vmem>>, %arg5: memref<8x!tpu.dma_semaphore, #tpu.memory_space<semaphore_mem>>) attributes {dimension_semantics = [#tpu.dimension_semantics<parallel>], iteration_bounds = array<i64: 1>, scalar_prefetch = 1 : i64, scratch_operands = 2 : i64, tpu.core_type = #tpu.core_type<tc>, window_params = [{}, {transform_indices = @transform_1, window_bounds = array<i64: 16, 128>}]} {
    %c16_i32 = arith.constant 16 : i32
    %0 = arith.muli %arg0, %c16_i32 : i32
    %c0_i32 = arith.constant 0 : i32
    %c8_i32 = arith.constant 8 : i32
    %1 = arith.addi %c0_i32, %c8_i32 : i32
    %c1_i32 = arith.constant 1 : i32
    scf.for %arg6 = %c0_i32 to %1 step %c1_i32  : i32 {
      %c1_i32_12 = arith.constant 1 : i32
      %8 = arith.muli %arg6, %c1_i32_12 : i32
      %c0_i32_13 = arith.constant 0 : i32
      %9 = arith.addi %c0_i32_13, %8 : i32
      %10 = arith.addi %0, %9 : i32
      %11 = arith.index_cast %10 : i32 to index
      %12 = memref.load %arg1[%11] : memref<16xi32, #tpu.memory_space<smem>>
      %c0_i32_14 = arith.constant 0 : i32
      %c31_i32 = arith.constant 31 : i32
      %13 = arith.maxsi %c0_i32_14, %12 : i32
      %14 = arith.minsi %c31_i32, %13 : i32
      %c8_i32_15 = arith.constant 8 : i32
      %c0_i32_16 = arith.constant 0 : i32
      %15 = arith.cmpi eq, %c8_i32_15, %c0_i32_16 : i32
      %c1_i32_17 = arith.constant 1 : i32
      %16 = arith.select %15, %c1_i32_17, %c8_i32_15 : i32
      %17 = arith.remsi %9, %16 : i32
      %c0_i32_18 = arith.constant 0 : i32
      %18 = arith.cmpi ne, %17, %c0_i32_18 : i32
      %c0_i32_19 = arith.constant 0 : i32
      %19 = arith.cmpi slt, %17, %c0_i32_19 : i32
      %c0_i32_20 = arith.constant 0 : i32
      %20 = arith.cmpi slt, %16, %c0_i32_20 : i32
      %21 = arith.xori %19, %20 : i1
      %22 = arith.andi %21, %18 : i1
      %23 = arith.addi %17, %16 : i32
      %24 = arith.select %22, %23, %17 : i32
      %c0_i32_21 = arith.constant 0 : i32
      %25 = tpu.memref_slice %arg2[%14, %c0_i32_21] : memref<32x128xf32, #tpu.memory_space<any>> -> memref<1x128xf32, #tpu.memory_space<any>>
      %c0_i32_22 = arith.constant 0 : i32
      %26 = tpu.memref_slice %arg4[%9, %c0_i32_22] : memref<16x128xf32, #tpu.memory_space<vmem>> -> memref<1x128xf32, #tpu.memory_space<vmem>>
      %27 = tpu.memref_slice %arg5[%24] : memref<8x!tpu.dma_semaphore, #tpu.memory_space<semaphore_mem>> -> memref<1x!tpu.dma_semaphore, #tpu.memory_space<semaphore_mem>>
      %28 = tpu.memref_squeeze %27 : memref<1x!tpu.dma_semaphore, #tpu.memory_space<semaphore_mem>> -> memref<!tpu.dma_semaphore, #tpu.memory_space<semaphore_mem>>
      tpu.enqueue_dma source(%25 : memref<1x128xf32, #tpu.memory_space<any>>) target(%26 : memref<1x128xf32, #tpu.memory_space<vmem>>) target_semaphore(%28 : memref<!tpu.dma_semaphore, #tpu.memory_space<semaphore_mem>>)
    }
    %c8_i32_0 = arith.constant 8 : i32
    %c0_i32_1 = arith.constant 0 : i32
    %c8_i32_2 = arith.constant 8 : i32
    %2 = arith.addi %c0_i32_1, %c8_i32_2 : i32
    %c1_i32_3 = arith.constant 1 : i32
    scf.for %arg6 = %c0_i32_1 to %2 step %c1_i32_3  : i32 {
      %c1_i32_12 = arith.constant 1 : i32
      %8 = arith.muli %arg6, %c1_i32_12 : i32
      %c8_i32_13 = arith.constant 8 : i32
      %9 = arith.addi %c8_i32_13, %8 : i32
      %c8_i32_14 = arith.constant 8 : i32
      %10 = arith.subi %9, %c8_i32_14 : i32
      %c8_i32_15 = arith.constant 8 : i32
      %c0_i32_16 = arith.constant 0 : i32
      %11 = arith.cmpi eq, %c8_i32_15, %c0_i32_16 : i32
      %c1_i32_17 = arith.constant 1 : i32
      %12 = arith.select %11, %c1_i32_17, %c8_i32_15 : i32
      %13 = arith.remsi %10, %12 : i32
      %c0_i32_18 = arith.constant 0 : i32
      %14 = arith.cmpi ne, %13, %c0_i32_18 : i32
      %c0_i32_19 = arith.constant 0 : i32
      %15 = arith.cmpi slt, %13, %c0_i32_19 : i32
      %c0_i32_20 = arith.constant 0 : i32
      %16 = arith.cmpi slt, %12, %c0_i32_20 : i32
      %17 = arith.xori %15, %16 : i1
      %18 = arith.andi %17, %14 : i1
      %19 = arith.addi %13, %12 : i32
      %20 = arith.select %18, %19, %13 : i32
      %c0_i32_21 = arith.constant 0 : i32
      %c0_i32_22 = arith.constant 0 : i32
      %21 = tpu.memref_slice %arg2[%c0_i32_21, %c0_i32_22] : memref<32x128xf32, #tpu.memory_space<any>> -> memref<1x128xf32, #tpu.memory_space<any>>
      %c0_i32_23 = arith.constant 0 : i32
      %22 = tpu.memref_slice %arg4[%10, %c0_i32_23] : memref<16x128xf32, #tpu.memory_space<vmem>> -> memref<1x128xf32, #tpu.memory_space<vmem>>
      %23 = tpu.memref_slice %arg5[%20] : memref<8x!tpu.dma_semaphore, #tpu.memory_space<semaphore_mem>> -> memref<1x!tpu.dma_semaphore, #tpu.memory_space<semaphore_mem>>
      %24 = tpu.memref_squeeze %23 : memref<1x!tpu.dma_semaphore, #tpu.memory_space<semaphore_mem>> -> memref<!tpu.dma_semaphore, #tpu.memory_space<semaphore_mem>>
      tpu.wait_dma2 semaphore(%24 : memref<!tpu.dma_semaphore, #tpu.memory_space<semaphore_mem>>) src(%21 : memref<1x128xf32, #tpu.memory_space<any>>) dst(%22 : memref<1x128xf32, #tpu.memory_space<vmem>>)
      %25 = arith.addi %0, %9 : i32
      %26 = arith.index_cast %25 : i32 to index
      %27 = memref.load %arg1[%26] : memref<16xi32, #tpu.memory_space<smem>>
      %c0_i32_24 = arith.constant 0 : i32
      %c31_i32 = arith.constant 31 : i32
      %28 = arith.maxsi %c0_i32_24, %27 : i32
      %29 = arith.minsi %c31_i32, %28 : i32
      %c8_i32_25 = arith.constant 8 : i32
      %c0_i32_26 = arith.constant 0 : i32
      %30 = arith.cmpi eq, %c8_i32_25, %c0_i32_26 : i32
      %c1_i32_27 = arith.constant 1 : i32
      %31 = arith.select %30, %c1_i32_27, %c8_i32_25 : i32
      %32 = arith.remsi %9, %31 : i32
      %c0_i32_28 = arith.constant 0 : i32
      %33 = arith.cmpi ne, %32, %c0_i32_28 : i32
      %c0_i32_29 = arith.constant 0 : i32
      %34 = arith.cmpi slt, %32, %c0_i32_29 : i32
      %c0_i32_30 = arith.constant 0 : i32
      %35 = arith.cmpi slt, %31, %c0_i32_30 : i32
      %36 = arith.xori %34, %35 : i1
      %37 = arith.andi %36, %33 : i1
      %38 = arith.addi %32, %31 : i32
      %39 = arith.select %37, %38, %32 : i32
      %c0_i32_31 = arith.constant 0 : i32
      %40 = tpu.memref_slice %arg2[%29, %c0_i32_31] : memref<32x128xf32, #tpu.memory_space<any>> -> memref<1x128xf32, #tpu.memory_space<any>>
      %c0_i32_32 = arith.constant 0 : i32
      %41 = tpu.memref_slice %arg4[%9, %c0_i32_32] : memref<16x128xf32, #tpu.memory_space<vmem>> -> memref<1x128xf32, #tpu.memory_space<vmem>>
      %42 = tpu.memref_slice %arg5[%39] : memref<8x!tpu.dma_semaphore, #tpu.memory_space<semaphore_mem>> -> memref<1x!tpu.dma_semaphore, #tpu.memory_space<semaphore_mem>>
      %43 = tpu.memref_squeeze %42 : memref<1x!tpu.dma_semaphore, #tpu.memory_space<semaphore_mem>> -> memref<!tpu.dma_semaphore, #tpu.memory_space<semaphore_mem>>
      tpu.enqueue_dma source(%40 : memref<1x128xf32, #tpu.memory_space<any>>) target(%41 : memref<1x128xf32, #tpu.memory_space<vmem>>) target_semaphore(%43 : memref<!tpu.dma_semaphore, #tpu.memory_space<semaphore_mem>>)
    }
    %c8_i32_4 = arith.constant 8 : i32
    %c0_i32_5 = arith.constant 0 : i32
    %c8_i32_6 = arith.constant 8 : i32
    %3 = arith.addi %c0_i32_5, %c8_i32_6 : i32
    %c1_i32_7 = arith.constant 1 : i32
    scf.for %arg6 = %c0_i32_5 to %3 step %c1_i32_7  : i32 {
      %c1_i32_12 = arith.constant 1 : i32
      %8 = arith.muli %arg6, %c1_i32_12 : i32
      %c8_i32_13 = arith.constant 8 : i32
      %9 = arith.addi %c8_i32_13, %8 : i32
      %c8_i32_14 = arith.constant 8 : i32
      %c0_i32_15 = arith.constant 0 : i32
      %10 = arith.cmpi eq, %c8_i32_14, %c0_i32_15 : i32
      %c1_i32_16 = arith.constant 1 : i32
      %11 = arith.select %10, %c1_i32_16, %c8_i32_14 : i32
      %12 = arith.remsi %9, %11 : i32
      %c0_i32_17 = arith.constant 0 : i32
      %13 = arith.cmpi ne, %12, %c0_i32_17 : i32
      %c0_i32_18 = arith.constant 0 : i32
      %14 = arith.cmpi slt, %12, %c0_i32_18 : i32
      %c0_i32_19 = arith.constant 0 : i32
      %15 = arith.cmpi slt, %11, %c0_i32_19 : i32
      %16 = arith.xori %14, %15 : i1
      %17 = arith.andi %16, %13 : i1
      %18 = arith.addi %12, %11 : i32
      %19 = arith.select %17, %18, %12 : i32
      %c0_i32_20 = arith.constant 0 : i32
      %c0_i32_21 = arith.constant 0 : i32
      %20 = tpu.memref_slice %arg2[%c0_i32_20, %c0_i32_21] : memref<32x128xf32, #tpu.memory_space<any>> -> memref<1x128xf32, #tpu.memory_space<any>>
      %c0_i32_22 = arith.constant 0 : i32
      %21 = tpu.memref_slice %arg4[%9, %c0_i32_22] : memref<16x128xf32, #tpu.memory_space<vmem>> -> memref<1x128xf32, #tpu.memory_space<vmem>>
      %22 = tpu.memref_slice %arg5[%19] : memref<8x!tpu.dma_semaphore, #tpu.memory_space<semaphore_mem>> -> memref<1x!tpu.dma_semaphore, #tpu.memory_space<semaphore_mem>>
      %23 = tpu.memref_squeeze %22 : memref<1x!tpu.dma_semaphore, #tpu.memory_space<semaphore_mem>> -> memref<!tpu.dma_semaphore, #tpu.memory_space<semaphore_mem>>
      tpu.wait_dma2 semaphore(%23 : memref<!tpu.dma_semaphore, #tpu.memory_space<semaphore_mem>>) src(%20 : memref<1x128xf32, #tpu.memory_space<any>>) dst(%21 : memref<1x128xf32, #tpu.memory_space<vmem>>)
    }
    %c8_i32_8 = arith.constant 8 : i32
    %c0 = arith.constant 0 : index
    %c0_9 = arith.constant 0 : index
    %4 = vector.load %arg4[%c0, %c0_9] : memref<16x128xf32, #tpu.memory_space<vmem>>, vector<16x128xf32>
    %cst = arith.constant 11.3137083 : f32
    %5 = vector.broadcast %cst : f32 to vector<16x128xf32>
    %6 = arith.mulf %4, %5 : vector<16x128xf32>
    %c0_10 = arith.constant 0 : index
    %c0_11 = arith.constant 0 : index
    %7 = vector.load %arg3[%c0_10, %c0_11] : memref<16x128xf32, #tpu.memory_space<vmem>>, vector<16x128xf32>
    tpu.vector_store %arg3[%c0_10, %c0_11], %6 {strides = array<i32>} : memref<16x128xf32, #tpu.memory_space<vmem>>, vector<16x128xf32>,
    return
  }
  func.func @transform_1(%arg0: i32, %arg1: memref<16xi32, #tpu.memory_space<smem>>) -> (i32, i32) {
    %c0_i32 = arith.constant 0 : i32
    %c0_i32_0 = arith.constant 0 : i32
    return %arg0, %c0_i32 : i32, i32
  }
}

</mosaic_0001>

<llo_original>
// kernel: tpu_custom_call.1
$region0: #{tpu_custom_call.1}
  #allocation0 [shape = 'u32[]', space=smem, size = 0x4, offset = 0x4, fixed_abs, tag = 'smem constant byte address 0x4 - core index']
  #allocation1 [shape = 'u32[72,128]{1,0:T(1,128)}', space=vmem, size = 0x9000, scoped, tag = 'internal scratch']
  #allocation2 [shape = 'f32[16,128]{1,0:T(8,128)}', space=vmem, size = 0x2000, scoped, tag = 'scratch operand']
  #allocation3 [shape = 's32[8]{0}', space=sflag, size = 0x20, scoped, tag = 'scratch operand']
  #allocation4 [shape = 's32[1]{0}', space=sflag, size = 0x4, scoped, tag = 'scoped memory for tpu_custom_call.1']
  #allocation5 [shape = 'u8[512]{0}', space=smem, size = 0x200, scoped, tag = 'prefetched SMEM operand 0']
  #allocation8 [shape = 's32[]', space=sflag, size = 0x4, offset = 0, fixed_abs, tag = 'sflag constant byte address 0x0 - dummy sync flag']
  #allocation9 [shape = 's32[]', space=sflag, size = 0x4, offset = 0, fixed_abs, tag = 'sflag constant byte address 0x0 - dummy sync flag']
  #allocation10 [shape = 'u32[]', space=smem, size = 0x4, offset = 0x44, fixed_abs, tag = 'smem constant byte address 0x44 - assertion arg 0']
  #allocation11 [shape = 'u32[]', space=smem, size = 0x4, offset = 0x48, fixed_abs, tag = 'smem constant byte address 0x48 - assertion arg 1']
  #allocation12 [shape = 's32[]', space=sflag, size = 0x4, offset = 0, fixed_abs, tag = 'sflag constant byte address 0x0 - dummy sync flag']
  #allocation13 [shape = 's32[]', space=sflag, size = 0x4, offset = 0, fixed_abs, tag = 'sflag constant byte address 0x0 - dummy sync flag']
  %s0 = inlined_call_operand.hbm [shape: s32[16], index: 0, kind: input, shape index: {}]
  %s1 = inlined_call_operand.hbm [shape: f32[32,128], index: 1, kind: input, shape index: {}]
  %s2 = inlined_call_operand.hbm [shape: f32[16,128], index: 2, kind: output, shape index: {}]
  %s3 = sld [smem:[#allocation0]]
  $region39: #{tpu_custom_call.1} parent=0
    _
  %s5 = ssub.s32 1, %s3
  %s6 = scalar_select 0, %s5, %s3
  %s8 = sshll.u32 %s0, 4
  %s9 = int_to_ptr.hbm [resolvable:$true] %s8
  %11 = dma.hbm_to_smem %s9, 16, [#allocation5], [#allocation4]
  %13 = dma.done [#allocation4], 16
  %14 = sfence
  $region1: #{tpu_custom_call.1} parent=0
    #allocation6 [shape = 'u8[8192]{0}', space=vmem, size = 0x2000, scoped, tag = 'output window, operand 0, single buffered']
    #allocation7 [shape = 's32[1]{0}', space=sflag, size = 0x4, scoped, tag = 'scoped memory for tpu_custom_call.1']
    %15 = vsyncpa [#allocation7], 0
    %s16 = smul.u32 0, 16
    loop: start=0, step=1, limit=8
    $region2: #{tpu_custom_call.1} parent=1 // loop_pre_header
      _
    $region3: #{tpu_custom_call.1} parent=1 // loop_header
      %s18 = sphi 0, %s22
      %p19 = scmp.ge.s32.totalorder %s18, 8
    $region4: #{tpu_custom_call.1} parent=1 // loop_header_branch
      %21 = sbr.rel (%p19) target = $region8
    $region5: #{tpu_custom_call.1} parent=1 // loop_body
      %s23 = sadd.s32 %s16, %s18
      %s24 = sld [smem:[#allocation5 + %s23]]
      %p25 = scmp.gt.s32.totalorder %s24, 0
      %s26 = scalar_select %p25, %s24, 0
      %p27 = scmp.lt.s32.totalorder %s26, 31
      %s28 = scalar_select %p27, %s26, 31
      %p29 = scmp.lt.s32.totalorder %s18, 0
      %s30 = ssub.s32 0, %s18
      %s31 = scalar_select %p29, %s30, %s18
      %s32 = sand.u32 %s31, 7
      %s33 = ssub.s32 0, %s32
      %s34 = scalar_select %p29, %s33, %s32
      %p35 = scmp.ne.s32.totalorder %s34, 0
      %p36 = scmp.lt.s32.totalorder %s34, 0
      %p37 = pnand %p36, %p35
      %p38 = pneg %p37
      %s39 = sadd.s32 %s34, 8
      %s40 = scalar_select %p38, %s39, %s34
      %s41 = scalar_lea.hbm %s1, %s28
      %s42 = scalar_lea.vmem [#allocation2], %s18
      %s43 = scalar_lea.sflag [#allocation3], %s40
      // Predicated region
      $region9: #{tpu_custom_call.1} parent=5 // pred_check
        _
      $region10: #{tpu_custom_call.1} parent=5 // pred_check_branch
        %45 = sbr.rel target = $region12
      $region11: #{tpu_custom_call.1} parent=5 // pred_region
        %46 = sst [smem:[#allocation10]] [#allocation9]
        %47 = sst [smem:[#allocation11]] [#allocation8]
      $region12: #{tpu_custom_call.1} parent=5 // pred_fallthru
        _
      %49 = shalt.err (0)
      %s51 = sshll.u32 %s41, 4
      %s52 = int_to_ptr.hbm [resolvable:$true] %s51
      %s53 = sshll.u32 %s42, 4
      %s54 = int_to_ptr.vmem [resolvable:$true] %s53
      %56 = dma.hbm_to_vmem [thread:$0]  %s52, 16, %s54, %s43
    $region6: #{tpu_custom_call.1} parent=1 // loop_footer
      %s22 = sadd.s32 1, %s18
    $region7: #{tpu_custom_call.1} parent=1 // loop_footer_branch
      %17 = sbr.rel target = $region3
    $region8: #{tpu_custom_call.1} parent=1 // loop_exit
      _
    loop: start=0, step=1, limit=8
    $region13: #{tpu_custom_call.1} parent=1 // loop_pre_header
      _
    $region14: #{tpu_custom_call.1} parent=1 // loop_header
      %s58 = sphi 0, %s62
      %p59 = scmp.ge.s32.totalorder %s58, 8
    $region15: #{tpu_custom_call.1} parent=1 // loop_header_branch
      %61 = sbr.rel (%p59) target = $region19
    $region16: #{tpu_custom_call.1} parent=1 // loop_body
      %s63 = sadd.s32 %s58, 8
      %p64 = scmp.lt.s32.totalorder %s58, 0
      %s65 = ssub.s32 0, %s58
      %s66 = scalar_select %p64, %s65, %s58
      %s67 = sand.u32 %s66, 7
      %s68 = ssub.s32 0, %s67
      %s69 = scalar_select %p64, %s68, %s67
      %p70 = scmp.ne.s32.totalorder %s69, 0
      %p71 = scmp.lt.s32.totalorder %s69, 0
      %p72 = pnand %p71, %p70
      %p73 = pneg %p72
      %s74 = sadd.s32 %s69, 8
      %s75 = scalar_select %p73, %s74, %s69
      %s76 = scalar_lea.sflag [#allocation3], %s75
      %s77 = smul.u32 1, 1
      %s78 = sshll.u32 %s77, 4
      %79 = dma.done %s76, %s78
      %s80 = sadd.s32 %s16, %s63
      %s81 = sld [smem:[#allocation5 + %s80]]
      %p82 = scmp.gt.s32.totalorder %s81, 0
      %s83 = scalar_select %p82, %s81, 0
      %p84 = scmp.lt.s32.totalorder %s83, 31
      %s85 = scalar_select %p84, %s83, 31
      %p86 = scmp.lt.s32.totalorder %s63, 0
      %s87 = ssub.s32 0, %s63
      %s88 = scalar_select %p86, %s87, %s63
      %s89 = sand.u32 %s88, 7
      %s90 = ssub.s32 0, %s89
      %s91 = scalar_select %p86, %s90, %s89
      %p92 = scmp.ne.s32.totalorder %s91, 0
      %p93 = scmp.lt.s32.totalorder %s91, 0
      %p94 = pnand %p93, %p92
      %p95 = pneg %p94
      %s96 = sadd.s32 %s91, 8
      %s97 = scalar_select %p95, %s96, %s91
      %s98 = scalar_lea.hbm %s1, %s85
      %s99 = scalar_lea.vmem [#allocation2], %s63
      %s100 = scalar_lea.sflag [#allocation3], %s97
      // Predicated region
      $region20: #{tpu_custom_call.1} parent=16 // pred_check
        _
      $region21: #{tpu_custom_call.1} parent=16 // pred_check_branch
        %102 = sbr.rel target = $region23
      $region22: #{tpu_custom_call.1} parent=16 // pred_region
        %103 = sst [smem:[#allocation10]] [#allocation13]
        %104 = sst [smem:[#allocation11]] [#allocation12]
      $region23: #{tpu_custom_call.1} parent=16 // pred_fallthru
        _
      %106 = shalt.err (0)
      %s108 = sshll.u32 %s98, 4
      %s109 = int_to_ptr.hbm [resolvable:$true] %s108
      %s110 = sshll.u32 %s99, 4
      %s111 = int_to_ptr.vmem [resolvable:$true] %s110
      %113 = dma.hbm_to_vmem [thread:$0]  %s109, 16, %s111, %s100
    $region17: #{tpu_custom_call.1} parent=1 // loop_footer
      %s62 = sadd.s32 1, %s58
    $region18: #{tpu_custom_call.1} parent=1 // loop_footer_branch
      %57 = sbr.rel target = $region14
    $region19: #{tpu_custom_call.1} parent=1 // loop_exit
      _
    loop: start=0, step=1, limit=8
    $region24: #{tpu_custom_call.1} parent=1 // loop_pre_header
      _
    $region25: #{tpu_custom_call.1} parent=1 // loop_header
      %s115 = sphi 0, %s119
      %p116 = scmp.ge.s32.totalorder %s115, 8
    $region26: #{tpu_custom_call.1} parent=1 // loop_header_branch
      %118 = sbr.rel (%p116) target = $region30
    $region27: #{tpu_custom_call.1} parent=1 // loop_body
      %s120 = sadd.s32 %s115, 8
      %p121 = scmp.lt.s32.totalorder %s120, 0
      %s122 = ssub.s32 0, %s120
      %s123 = scalar_select %p121, %s122, %s120
      %s124 = sand.u32 %s123, 7
      %s125 = ssub.s32 0, %s124
      %s126 = scalar_select %p121, %s125, %s124
      %p127 = scmp.ne.s32.totalorder %s126, 0
      %p128 = scmp.lt.s32.totalorder %s126, 0
      %p129 = pnand %p128, %p127
      %p130 = pneg %p129
      %s131 = sadd.s32 %s126, 8
      %s132 = scalar_select %p130, %s131, %s126
      %s133 = scalar_lea.sflag [#allocation3], %s132
      %s134 = smul.u32 1, 1
      %s135 = sshll.u32 %s134, 4
      %136 = dma.done %s133, %s135
    $region28: #{tpu_custom_call.1} parent=1 // loop_footer
      %s119 = sadd.s32 1, %s115
    $region29: #{tpu_custom_call.1} parent=1 // loop_footer_branch
      %114 = sbr.rel target = $region25
    $region30: #{tpu_custom_call.1} parent=1 // loop_exit
      _
    %v137 = vld [vmem:[#allocation2] sm:$0xff]
    %v138 = vld [vmem:[#allocation2 + $0x8] sm:$0xff]
    %v139 = vmul.f32 %v137, 11.313708
    %v140 = vmul.f32 %v138, 11.313708
    %141 = vst [vmem:[#allocation6] sm:$0xff] %v139
    %142 = vst [vmem:[#allocation6 + $0x8] sm:$0xff] %v140
    // Predicated region
    $region31: #{tpu_custom_call.1} parent=1 // pred_check
      _
    $region32: #{tpu_custom_call.1} parent=1 // pred_check_branch
      %144 = sbr.rel (0) target = $region34
    $region33: #{tpu_custom_call.1} parent=1 // pred_region
      %146 = vsyncadd [#allocation7], 0
      %s147 = sshll.u32 [#allocation6], 4
      %s148 = int_to_ptr.vmem [resolvable:$true] %s147
      %s149 = sshll.u32 %s2, 4
      %s150 = int_to_ptr.hbm [resolvable:$true] %s149
      %155 = dma.vmem_to_hbm [thread:$0]  %s148, 256, %s150, [#allocation7], 128, 128, 8
    $region34: #{tpu_custom_call.1} parent=1 // pred_fallthru
      _
    // Predicated region
    $region35: #{tpu_custom_call.1} parent=1 // pred_check
      _
    $region36: #{tpu_custom_call.1} parent=1 // pred_check_branch
      %157 = sbr.rel (0) target = $region38
    $region37: #{tpu_custom_call.1} parent=1 // pred_region
      %159 = dma.done [#allocation7], 256
    $region38: #{tpu_custom_call.1} parent=1 // pred_fallthru
      _
    %160 = vsyncpa [#allocation7], 1
  %161 = vsyncmov [#allocation3]
  %s162 = vpop.sfrf %161
  %p163 = scmp.eq.s32.totalorder %s162, 0
  %p164 = pneg %p163
  %166 = shalt.err (%p164)
  %s167 = scalar_lea.sflag [#allocation3], 1
  %168 = vsyncmov %s167
  %s169 = vpop.sfrf %168
  %p170 = scmp.eq.s32.totalorder %s169, 0
  %p171 = pneg %p170
  %173 = shalt.err (%p171)
  %s174 = scalar_lea.sflag [#allocation3], 2
  %175 = vsyncmov %s174
  %s176 = vpop.sfrf %175
  %p177 = scmp.eq.s32.totalorder %s176, 0
  %p178 = pneg %p177
  %180 = shalt.err (%p178)
  %s181 = scalar_lea.sflag [#allocation3], 3
  %182 = vsyncmov %s181
  %s183 = vpop.sfrf %182
  %p184 = scmp.eq.s32.totalorder %s183, 0
  %p185 = pneg %p184
  %187 = shalt.err (%p185)
  %s188 = scalar_lea.sflag [#allocation3], 4
  %189 = vsyncmov %s188
  %s190 = vpop.sfrf %189
  %p191 = scmp.eq.s32.totalorder %s190, 0
  %p192 = pneg %p191
  %194 = shalt.err (%p192)
  %s195 = scalar_lea.sflag [#allocation3], 5
  %196 = vsyncmov %s195
  %s197 = vpop.sfrf %196
  %p198 = scmp.eq.s32.totalorder %s197, 0
  %p199 = pneg %p198
  %201 = shalt.err (%p199)
  %s202 = scalar_lea.sflag [#allocation3], 6
  %203 = vsyncmov %s202
  %s204 = vpop.sfrf %203
  %p205 = scmp.eq.s32.totalorder %s204, 0
  %p206 = pneg %p205
  %208 = shalt.err (%p206)
  %s209 = scalar_lea.sflag [#allocation3], 7
  %210 = vsyncmov %s209
  %s211 = vpop.sfrf %210
  %p212 = scmp.eq.s32.totalorder %s211, 0
  %p213 = pneg %p212
  %215 = shalt.err (%p213)

</llo_original>
